<compile_context>
chip_gen: v6e
topology: v6e:2x2x1
jax: 0.10.0
libtpu: 0.0.40
codegen_flags: <defaults>
</compile_context>

<pallas_src>
import jax
import jax.numpy as jnp
from jax.experimental import pallas as pl
from jax.experimental.pallas import tpu as pltpu


def _round_up(x: int, m: int) -> int:
    return ((x + m - 1) // m) * m


def _post_encoding_kernel(x_ref, w_ref, b_ref, o_ref):
    # x_ref: (TR, 2r)  packed activations (r consecutive positions per row)
    # w_ref: (2r, L)   block-diagonal packed weight, resident across the grid
    # b_ref: (1,  L)   lane-tiled bias, resident across the grid
    # o_ref: (TR, L)   lane-dense packed output, L = r * emb_dim (128 when packed)
    o_ref[...] = (
        jnp.dot(
            x_ref[...],
            w_ref[...],
            preferred_element_type=jnp.float32,
            precision=jax.lax.Precision.HIGHEST,
        )
        + b_ref[...]
    )


def post_encoding(acts: jax.Array, weight: jax.Array, bias: jax.Array,
                  *, max_tile_rows: int = 1024) -> jax.Array:
    """PostEncoding.forward: Linear(2, emb_dim) applied to acts.float().

    acts:   (..., 2)      node action features (any numeric dtype)
    weight: (emb_dim, 2)  torch nn.Linear weight layout
    bias:   (emb_dim,)
    returns (..., emb_dim) float32
    """
    emb_dim = weight.shape[0]
    assert weight.shape == (emb_dim, 2)
    assert acts.shape[-1] == 2
    lead = acts.shape[:-1]

    x = acts.reshape(-1, 2).astype(jnp.float32)          # matches .float()
    m = x.shape[0]

    # Lane packing factor: r consecutive positions per kernel row so the output
    # lane width is r*emb_dim (=128 whenever emb_dim divides 128).
    if emb_dim < 128 and 128 % emb_dim == 0:
        r = 128 // emb_dim
    else:
        r = 1
    L = r * emb_dim

    # Packed parameters (tiny; built once in the wrapper, resident in VMEM).
    w_packed = jnp.kron(jnp.eye(r, dtype=jnp.float32),
                        weight.astype(jnp.float32).T)            # (2r, L)
    b_packed = jnp.tile(bias.astype(jnp.float32), r).reshape(1, L)

    rows_needed = -(-m // r)                                      # packed rows of real work

    # Tile sizing: as big as possible (overhead amortization), but
    #  * keep >=2 grid steps when there is enough work (v7x dual TensorCore),
    #  * respect a VMEM budget derived from the lane width L (v7x has 64 MiB).
    vmem_budget = 8 * 1024 * 1024
    rows_vmem_cap = max(8, (vmem_budget // (16 * L)) // 8 * 8)
    half = -(-rows_needed // 2)
    tile_rows = max(8, min(max_tile_rows, rows_vmem_cap, _round_up(half, 8)))
    rows_pad = _round_up(rows_needed, tile_rows)
    m_pad = rows_pad * r

    if m_pad != m:
        x = jnp.pad(x, ((0, m_pad - m), (0, 0)))                  # pads compute bias rows, sliced off
    x_packed = x.reshape(rows_pad, 2 * r)                         # same contiguous bytes (free view)

    grid = (rows_pad // tile_rows,)

    out_packed = pl.pallas_call(
        _post_encoding_kernel,
        out_shape=jax.ShapeDtypeStruct((rows_pad, L), jnp.float32),
        grid_spec=pltpu.PrefetchScalarGridSpec(
            num_scalar_prefetch=0,
            grid=grid,
            in_specs=[
                pl.BlockSpec((tile_rows, 2 * r), lambda i: (i, 0)),   # packed acts tile
                pl.BlockSpec((2 * r, L), lambda i: (0, 0)),           # packed weight (resident)
                pl.BlockSpec((1, L), lambda i: (0, 0)),               # packed bias (resident)
            ],
            out_specs=pl.BlockSpec((tile_rows, L), lambda i: (i, 0)),
        ),
        compiler_params=pltpu.CompilerParams(
            dimension_semantics=("parallel",),
        ),
    )(x_packed, w_packed, b_packed)

    # Packed bytes == natural (m_pad, emb_dim) bytes: free reshape, then drop padding.
    out = out_packed.reshape(m_pad, emb_dim)[:m]
    return out.reshape(*lead, emb_dim)


if __name__ == "__main__":
    # TODO(synk): the torch module reads `data.acts` from a graph batch object;
    # here the kernel takes the acts tensor directly.
    key = jax.random.PRNGKey(0)
    k_acts, k_w, k_b = jax.random.split(key, 3)

    num_nodes, emb_dim = 16, 32
    acts = jax.random.normal(k_acts, (num_nodes, 2), dtype=jnp.float32)

    # Deterministic "parameters" of nn.Linear(2, emb_dim) (torch weight layout & init range).
    bound = 1.0 / jnp.sqrt(2.0)
    weight = jax.random.uniform(k_w, (emb_dim, 2), minval=-bound, maxval=bound,
                                dtype=jnp.float32)
    bias = jax.random.uniform(k_b, (emb_dim,), minval=-bound, maxval=bound,
                              dtype=jnp.float32)

    out = post_encoding(acts, weight, bias)
    out = jax.block_until_ready(out)
    assert out.shape == (num_nodes, emb_dim), out.shape

    # Pure-JAX reference (mirrors the PyTorch forward exactly).
    ref = jnp.dot(acts.astype(jnp.float32), weight.T,
                  precision=jax.lax.Precision.HIGHEST) + bias
    assert ref.shape == out.shape
    assert jnp.allclose(out, ref, atol=1e-5, rtol=1e-5), float(jnp.max(jnp.abs(out - ref)))

    print("KERNEL_OK")
</pallas_src>

<mosaic_0001>
module attributes {stable_mosaic.version = 11 : i64} {
  func.func @_post_encoding_kernel(%arg0: i32, %arg1: memref<8x8xf32, #tpu.memory_space<vmem>>, %arg2: memref<8x128xf32, #tpu.memory_space<vmem>>, %arg3: memref<1x128xf32, #tpu.memory_space<vmem>>, %arg4: memref<8x128xf32, #tpu.memory_space<vmem>>) attributes {dimension_semantics = [#tpu.dimension_semantics<parallel>], iteration_bounds = array<i64: 1>, scalar_prefetch = 0 : i64, scratch_operands = 0 : i64, tpu.core_type = #tpu.core_type<tc>, window_params = [{transform_indices = @transform_0, window_bounds = array<i64: 8, 8>}, {pipeline_mode = #tpu.pipeline_mode<synchronous>, transform_indices = @transform_1, window_bounds = array<i64: 8, 128>}, {pipeline_mode = #tpu.pipeline_mode<synchronous>, transform_indices = @transform_2, window_bounds = array<i64: 1, 128>}, {transform_indices = @transform_3, window_bounds = array<i64: 8, 128>}]} {
    %c0 = arith.constant 0 : index
    %c0_0 = arith.constant 0 : index
    %0 = vector.load %arg1[%c0, %c0_0] : memref<8x8xf32, #tpu.memory_space<vmem>>, vector<8x8xf32>
    %c0_1 = arith.constant 0 : index
    %c0_2 = arith.constant 0 : index
    %1 = vector.load %arg2[%c0_1, %c0_2] : memref<8x128xf32, #tpu.memory_space<vmem>>, vector<8x128xf32>
    %cst = arith.constant dense<0.000000e+00> : vector<8x128xf32>
    %2 = tpu.matmul %0, %1, %cst {dimension_numbers = #tpu.dot_dimension_numbers<[1], [0], [0], [1], [0, 0, 1, 1], [], []>, precision = #tpu.contract_precision<fp32>} : vector<8x8xf32>, vector<8x128xf32>, vector<8x128xf32> -> vector<8x128xf32>
    %c0_3 = arith.constant 0 : index
    %c0_4 = arith.constant 0 : index
    %3 = vector.load %arg3[%c0_3, %c0_4] : memref<1x128xf32, #tpu.memory_space<vmem>>, vector<1x128xf32>
    %4 = vector.broadcast %3 : vector<1x128xf32> to vector<8x128xf32>
    %5 = arith.addf %2, %4 : vector<8x128xf32>
    %c0_5 = arith.constant 0 : index
    %c0_6 = arith.constant 0 : index
    %6 = vector.load %arg4[%c0_5, %c0_6] : memref<8x128xf32, #tpu.memory_space<vmem>>, vector<8x128xf32>
    tpu.vector_store %arg4[%c0_5, %c0_6], %5 {strides = array<i32>} : memref<8x128xf32, #tpu.memory_space<vmem>>, vector<8x128xf32>,
    return
  }
  func.func @transform_0(%arg0: i32) -> (i32, i32) {
    %c0_i32 = arith.constant 0 : i32
    %c0_i32_0 = arith.constant 0 : i32
    return %arg0, %c0_i32 : i32, i32
  }
  func.func @transform_1(%arg0: i32) -> (i32, i32) {
    %c0_i32 = arith.constant 0 : i32
    %c0_i32_0 = arith.constant 0 : i32
    %c0_i32_1 = arith.constant 0 : i32
    return %c0_i32, %c0_i32_0 : i32, i32
  }
  func.func @transform_2(%arg0: i32) -> (i32, i32) {
    %c0_i32 = arith.constant 0 : i32
    %c0_i32_0 = arith.constant 0 : i32
    %c0_i32_1 = arith.constant 0 : i32
    return %c0_i32, %c0_i32_0 : i32, i32
  }
  func.func @transform_3(%arg0: i32) -> (i32, i32) {
    %c0_i32 = arith.constant 0 : i32
    %c0_i32_0 = arith.constant 0 : i32
    return %arg0, %c0_i32 : i32, i32
  }
}

</mosaic_0001>

<llo_original>
// kernel: tpu_custom_call.1
$region0: #{tpu_custom_call.1}
  #allocation0 [shape = 'u32[]', space=smem, size = 0x4, offset = 0x4, fixed_abs, tag = 'smem constant byte address 0x4 - core index']
  #allocation1 [shape = 'u32[144,128]{1,0:T(1,128)}', space=vmem, size = 0x12000, scoped, tag = 'internal scratch']
  %s0 = inlined_call_operand.hbm [shape: f32[8,8], index: 0, kind: input, shape index: {}]
  %s1 = inlined_call_operand.hbm [shape: f32[8,128], index: 1, kind: input, shape index: {}]
  %s2 = inlined_call_operand.vmem [shape: f32[1,128], index: 2, kind: input, shape index: {}]
  %s3 = inlined_call_operand.hbm [shape: f32[8,128], index: 3, kind: output, shape index: {}]
  %s4 = sld [smem:[#allocation0]]
  $region30: #{tpu_custom_call.1} parent=0
    _
  %s6 = ssub.s32 1, %s4
  %s7 = scalar_select 0, %s6, %s4
  $region1: #{tpu_custom_call.1} parent=0
    #allocation2 [shape = 'u8[4096]{0}', space=vmem, size = 0x1000, scoped, tag = 'input window, operand 0, single buffered']
    #allocation3 [shape = 's32[1]{0}', space=sflag, size = 0x4, scoped, tag = 'scoped memory for tpu_custom_call.1']
    #allocation4 [shape = 's32[1]{0}', space=sflag, size = 0x4, scoped, tag = 'scoped memory for tpu_custom_call.1']
    #allocation5 [shape = 'u8[4096]{0}', space=vmem, size = 0x1000, scoped, tag = 'input window, operand 1, single buffered']
    #allocation6 [shape = 's32[1]{0}', space=sflag, size = 0x4, scoped, tag = 'scoped memory for tpu_custom_call.1']
    #allocation7 [shape = 'u8[4096]{0}', space=vmem, size = 0x1000, scoped, tag = 'output window, operand 0, single buffered']
    %8 = vsyncpa [#allocation3], 0
    %9 = vsyncpa [#allocation6], 0
    %10 = vsyncpa [#allocation4], 0
    // Predicated region
    $region2: #{tpu_custom_call.1} parent=1 // pred_check
      _
    $region3: #{tpu_custom_call.1} parent=1 // pred_check_branch
      %12 = sbr.rel (0) target = $region5
    $region4: #{tpu_custom_call.1} parent=1 // pred_region
      %s14 = ssub.s32 128, 128
      %15 = vsyncadd [#allocation3], %s14
      %s17 = sshll.u32 [#allocation2], 4
      %s18 = int_to_ptr.vmem [resolvable:$true] %s17
      %20 = dma.hbm_to_vmem [thread:$0]  %s0, 128, %s18, [#allocation3]
    $region5: #{tpu_custom_call.1} parent=1 // pred_fallthru
      _
    // Predicated region
    $region6: #{tpu_custom_call.1} parent=1 // pred_check
      _
    $region7: #{tpu_custom_call.1} parent=1 // pred_check_branch
      %22 = sbr.rel (0) target = $region9
    $region8: #{tpu_custom_call.1} parent=1 // pred_region
      %s24 = ssub.s32 128, 128
      %25 = vsyncadd [#allocation6], %s24
      %s27 = sshll.u32 [#allocation5], 4
      %s28 = int_to_ptr.vmem [resolvable:$true] %s27
      %30 = dma.hbm_to_vmem [thread:$0]  %s1, 128, %s28, [#allocation6]
    $region9: #{tpu_custom_call.1} parent=1 // pred_fallthru
      _
    // Predicated region
    $region10: #{tpu_custom_call.1} parent=1 // pred_check
      _
    $region11: #{tpu_custom_call.1} parent=1 // pred_check_branch
      %32 = sbr.rel (0) target = $region13
    $region12: #{tpu_custom_call.1} parent=1 // pred_region
      _
    $region13: #{tpu_custom_call.1} parent=1 // pred_fallthru
      _
    // Predicated region
    $region14: #{tpu_custom_call.1} parent=1 // pred_check
      _
    $region15: #{tpu_custom_call.1} parent=1 // pred_check_branch
      %34 = sbr.rel (0) target = $region17
    $region16: #{tpu_custom_call.1} parent=1 // pred_region
      %35 = dma.done [#allocation3], 128
    $region17: #{tpu_custom_call.1} parent=1 // pred_fallthru
      _
    // Predicated region
    $region18: #{tpu_custom_call.1} parent=1 // pred_check
      _
    $region19: #{tpu_custom_call.1} parent=1 // pred_check_branch
      %37 = sbr.rel (0) target = $region21
    $region20: #{tpu_custom_call.1} parent=1 // pred_region
      %38 = dma.done [#allocation6], 128
    $region21: #{tpu_custom_call.1} parent=1 // pred_fallthru
      _
    %v39 = vld [vmem:[#allocation2] sm:$0xff]
    %v40 = vld [vmem:[#allocation5] sm:$0xff]
    %v41 = vld [vmem:[%s2] sm:$0x1]
    %v43 = vlaneseq
    %v44 = vshrl.u32 %v43, 7
    %v45 = vsub.s32 0, %v44
    %v46 = vrot.slane %v41, %v45
    %vm48 = vcmask 64512
    %v50 = vsel %vm48, %v39, 0
    %52 = vmatprep.subr.mxu0 0.0
    %53 = vmatpush1.msra.mxu0 0.0
    %54 = vmatprep.subr.mxu0 0.0
    %55 = vmatpush1.msra.mxu0 0.0
    %56 = vmatprep.subr.mxu0 0.0
    %57 = vmatpush1.msra.mxu0 0.0
    %58 = vmatprep.subr.mxu0 0.0
    %59 = vmatpush1.msra.mxu0 0.0
    %60 = vmatprep.subr.mxu0 0.0
    %61 = vmatpush1.msra.mxu0 0.0
    %62 = vmatprep.subr.mxu0 0.0
    %63 = vmatpush1.msra.mxu0 0.0
    %64 = vmatprep.subr.mxu0 0.0
    %65 = vmatpush1.msra.mxu0 0.0
    %66 = vmatprep.subr.mxu0 0.0
    %67 = vmatpush1.msra.mxu0 0.0
    %68 = vmatprep.subr.mxu0 0.0
    %69 = vmatpush1.msra.mxu0 0.0
    %70 = vmatprep.subr.mxu0 0.0
    %71 = vmatpush1.msra.mxu0 0.0
    %72 = vmatprep.subr.mxu0 0.0
    %73 = vmatpush1.msra.mxu0 0.0
    %74 = vmatprep.subr.mxu0 0.0
    %75 = vmatpush1.msra.mxu0 0.0
    %76 = vmatprep.subr.mxu0 0.0
    %77 = vmatpush1.msra.mxu0 0.0
    %78 = vmatprep.subr.mxu0 0.0
    %79 = vmatpush1.msra.mxu0 0.0
    %80 = vmatprep.subr.mxu0 0.0
    %81 = vmatpush1.msra.mxu0 0.0
    %82 = vmatprep.subr.mxu0 0.0
    %v83 = vand.u32 %v40, 4294901760
    %84 = vmatpush1.msra.mxu0 %v83
    %85 = vmatprep.subr.mxu0 0.0
    %86 = vmatpush2.msra.mxu0 0.0
    %87 = vmatprep.subr.mxu0 0.0
    %88 = vmatpush2.msra.mxu0 0.0
    %89 = vmatprep.subr.mxu0 0.0
    %90 = vmatpush2.msra.mxu0 0.0
    %91 = vmatprep.subr.mxu0 0.0
    %92 = vmatpush2.msra.mxu0 0.0
    %93 = vmatprep.subr.mxu0 0.0
    %94 = vmatpush2.msra.mxu0 0.0
    %95 = vmatprep.subr.mxu0 0.0
    %96 = vmatpush2.msra.mxu0 0.0
    %97 = vmatprep.subr.mxu0 0.0
    %98 = vmatpush2.msra.mxu0 0.0
    %99 = vmatprep.subr.mxu0 0.0
    %100 = vmatpush2.msra.mxu0 0.0
    %101 = vmatprep.subr.mxu0 0.0
    %102 = vmatpush2.msra.mxu0 0.0
    %103 = vmatprep.subr.mxu0 0.0
    %104 = vmatpush2.msra.mxu0 0.0
    %105 = vmatprep.subr.mxu0 0.0
    %106 = vmatpush2.msra.mxu0 0.0
    %107 = vmatprep.subr.mxu0 0.0
    %108 = vmatpush2.msra.mxu0 0.0
    %109 = vmatprep.subr.mxu0 0.0
    %110 = vmatpush2.msra.mxu0 0.0
    %111 = vmatprep.subr.mxu0 0.0
    %112 = vmatpush2.msra.mxu0 0.0
    %113 = vmatprep.subr.mxu0 0.0
    %114 = vmatpush2.msra.mxu0 0.0
    %115 = vmatprep.subr.mxu0 0.0
    %116 = vmatpush2.msra.mxu0 0.0
    %117 = vmatprep.mubr.f32.mxu0 0.0
    %v118 = vand.u32 %v50, 4294901760
    %v119 = vsub.f32 %v50, %v118
    %v120 = vand.u32 %v119, 4294901760
    %v121 = vsub.f32 %v119, %v120
    %v122 = vand.u32 %v121, 4294901760
    %123 = vmatmul.mubr.f32.gmra.mxu0 %v122
    %v124 = vpop.f32.mrf.mxu0
    %v125 = vadd.f32 %v46, %v124
    %v126 = vpop.f32.mrf.mxu0
    %127 = vdwg.mxu0
    %128 = vmatprep.subr.mxu0 0.0
    %129 = vmatpush1.msra.mxu0 0.0
    %130 = vmatprep.subr.mxu0 0.0
    %131 = vmatpush1.msra.mxu0 0.0
    %132 = vmatprep.subr.mxu0 0.0
    %133 = vmatpush1.msra.mxu0 0.0
    %134 = vmatprep.subr.mxu0 0.0
    %135 = vmatpush1.msra.mxu0 0.0
    %136 = vmatprep.subr.mxu0 0.0
    %137 = vmatpush1.msra.mxu0 0.0
    %138 = vmatprep.subr.mxu0 0.0
    %139 = vmatpush1.msra.mxu0 0.0
    %140 = vmatprep.subr.mxu0 0.0
    %141 = vmatpush1.msra.mxu0 0.0
    %142 = vmatprep.subr.mxu0 0.0
    %143 = vmatpush1.msra.mxu0 0.0
    %144 = vmatprep.subr.mxu0 0.0
    %145 = vmatpush1.msra.mxu0 0.0
    %146 = vmatprep.subr.mxu0 0.0
    %147 = vmatpush1.msra.mxu0 0.0
    %148 = vmatprep.subr.mxu0 0.0
    %149 = vmatpush1.msra.mxu0 0.0
    %150 = vmatprep.subr.mxu0 0.0
    %151 = vmatpush1.msra.mxu0 0.0
    %152 = vmatprep.subr.mxu0 0.0
    %153 = vmatpush1.msra.mxu0 0.0
    %154 = vmatprep.subr.mxu0 0.0
    %155 = vmatpush1.msra.mxu0 0.0
    %156 = vmatprep.subr.mxu0 0.0
    %157 = vmatpush1.msra.mxu0 0.0
    %158 = vmatprep.subr.mxu0 0.0
    %v159 = vand.u32 %v40, 4294901760
    %v160 = vsub.f32 %v40, %v159
    %v161 = vand.u32 %v160, 4294901760
    %v162 = vsub.f32 %v160, %v161
    %v163 = vand.u32 %v162, 4294901760
    %164 = vmatpush1.msra.mxu0 %v163
    %165 = vmatprep.subr.mxu0 0.0
    %166 = vmatpush2.msra.mxu0 0.0
    %167 = vmatprep.subr.mxu0 0.0
    %168 = vmatpush2.msra.mxu0 0.0
    %169 = vmatprep.subr.mxu0 0.0
    %170 = vmatpush2.msra.mxu0 0.0
    %171 = vmatprep.subr.mxu0 0.0
    %172 = vmatpush2.msra.mxu0 0.0
    %173 = vmatprep.subr.mxu0 0.0
    %174 = vmatpush2.msra.mxu0 0.0
    %175 = vmatprep.subr.mxu0 0.0
    %176 = vmatpush2.msra.mxu0 0.0
    %177 = vmatprep.subr.mxu0 0.0
    %178 = vmatpush2.msra.mxu0 0.0
    %179 = vmatprep.subr.mxu0 0.0
    %180 = vmatpush2.msra.mxu0 0.0
    %181 = vmatprep.subr.mxu0 0.0
    %182 = vmatpush2.msra.mxu0 0.0
    %183 = vmatprep.subr.mxu0 0.0
    %184 = vmatpush2.msra.mxu0 0.0
    %185 = vmatprep.subr.mxu0 0.0
    %186 = vmatpush2.msra.mxu0 0.0
    %187 = vmatprep.subr.mxu0 0.0
    %188 = vmatpush2.msra.mxu0 0.0
    %189 = vmatprep.subr.mxu0 0.0
    %190 = vmatpush2.msra.mxu0 0.0
    %191 = vmatprep.subr.mxu0 0.0
    %192 = vmatpush2.msra.mxu0 0.0
    %193 = vmatprep.subr.mxu0 0.0
    %194 = vmatpush2.msra.mxu0 0.0
    %195 = vmatprep.subr.mxu0 0.0
    %196 = vmatpush2.msra.mxu0 0.0
    %197 = vmatprep.mubr.f32.mxu0 0.0
    %v198 = vand.u32 %v50, 4294901760
    %199 = vmatmul.mubr.f32.gmra.mxu0 %v198
    %v200 = vpop.f32.mrf.mxu0
    %v201 = vadd.f32 %v125, %v200
    %v202 = vpop.f32.mrf.mxu0
    %203 = vdwg.mxu0
    %204 = vmatprep.subr.mxu0 0.0
    %205 = vmatpush1.msra.mxu0 0.0
    %206 = vmatprep.subr.mxu0 0.0
    %207 = vmatpush1.msra.mxu0 0.0
    %208 = vmatprep.subr.mxu0 0.0
    %209 = vmatpush1.msra.mxu0 0.0
    %210 = vmatprep.subr.mxu0 0.0
    %211 = vmatpush1.msra.mxu0 0.0
    %212 = vmatprep.subr.mxu0 0.0
    %213 = vmatpush1.msra.mxu0 0.0
    %214 = vmatprep.subr.mxu0 0.0
    %215 = vmatpush1.msra.mxu0 0.0
    %216 = vmatprep.subr.mxu0 0.0
    %217 = vmatpush1.msra.mxu0 0.0
    %218 = vmatprep.subr.mxu0 0.0
    %219 = vmatpush1.msra.mxu0 0.0
    %220 = vmatprep.subr.mxu0 0.0
    %221 = vmatpush1.msra.mxu0 0.0
    %222 = vmatprep.subr.mxu0 0.0
    %223 = vmatpush1.msra.mxu0 0.0
    %224 = vmatprep.subr.mxu0 0.0
    %225 = vmatpush1.msra.mxu0 0.0
    %226 = vmatprep.subr.mxu0 0.0
    %227 = vmatpush1.msra.mxu0 0.0
    %228 = vmatprep.subr.mxu0 0.0
    %229 = vmatpush1.msra.mxu0 0.0
    %230 = vmatprep.subr.mxu0 0.0
    %231 = vmatpush1.msra.mxu0 0.0
    %232 = vmatprep.subr.mxu0 0.0
    %233 = vmatpush1.msra.mxu0 0.0
    %234 = vmatprep.subr.mxu0 0.0
    %v235 = vand.u32 %v40, 4294901760
    %v236 = vsub.f32 %v40, %v235
    %237 = vmatpush1.msra.mxu0 %v236
    %238 = vmatprep.subr.mxu0 0.0
    %239 = vmatpush2.msra.mxu0 0.0
    %240 = vmatprep.subr.mxu0 0.0
    %241 = vmatpush2.msra.mxu0 0.0
    %242 = vmatprep.subr.mxu0 0.0
    %243 = vmatpush2.msra.mxu0 0.0
    %244 = vmatprep.subr.mxu0 0.0
    %245 = vmatpush2.msra.mxu0 0.0
    %246 = vmatprep.subr.mxu0 0.0
    %247 = vmatpush2.msra.mxu0 0.0
    %248 = vmatprep.subr.mxu0 0.0
    %249 = vmatpush2.msra.mxu0 0.0
    %250 = vmatprep.subr.mxu0 0.0
    %251 = vmatpush2.msra.mxu0 0.0
    %252 = vmatprep.subr.mxu0 0.0
    %253 = vmatpush2.msra.mxu0 0.0
    %254 = vmatprep.subr.mxu0 0.0
    %255 = vmatpush2.msra.mxu0 0.0
    %256 = vmatprep.subr.mxu0 0.0
    %257 = vmatpush2.msra.mxu0 0.0
    %258 = vmatprep.subr.mxu0 0.0
    %259 = vmatpush2.msra.mxu0 0.0
    %260 = vmatprep.subr.mxu0 0.0
    %261 = vmatpush2.msra.mxu0 0.0
    %262 = vmatprep.subr.mxu0 0.0
    %263 = vmatpush2.msra.mxu0 0.0
    %264 = vmatprep.subr.mxu0 0.0
    %265 = vmatpush2.msra.mxu0 0.0
    %266 = vmatprep.subr.mxu0 0.0
    %267 = vmatpush2.msra.mxu0 0.0
    %268 = vmatprep.subr.mxu0 0.0
    %269 = vmatpush2.msra.mxu0 0.0
    %270 = vmatprep.mubr.f32.mxu0 0.0
    %v271 = vand.u32 %v50, 4294901760
    %v272 = vsub.f32 %v50, %v271
    %273 = vmatmul.mubr.f32.gmra.mxu0 %v272
    %v274 = vpop.f32.mrf.mxu0
    %v275 = vadd.f32 %v201, %v274
    %v276 = vpop.f32.mrf.mxu0
    %277 = vdwg.mxu0
    %278 = vmatprep.subr.mxu0 0.0
    %279 = vmatpush1.msra.mxu0 0.0
    %280 = vmatprep.subr.mxu0 0.0
    %281 = vmatpush1.msra.mxu0 0.0
    %282 = vmatprep.subr.mxu0 0.0
    %283 = vmatpush1.msra.mxu0 0.0
    %284 = vmatprep.subr.mxu0 0.0
    %285 = vmatpush1.msra.mxu0 0.0
    %286 = vmatprep.subr.mxu0 0.0
    %287 = vmatpush1.msra.mxu0 0.0
    %288 = vmatprep.subr.mxu0 0.0
    %289 = vmatpush1.msra.mxu0 0.0
    %290 = vmatprep.subr.mxu0 0.0
    %291 = vmatpush1.msra.mxu0 0.0
    %292 = vmatprep.subr.mxu0 0.0
    %293 = vmatpush1.msra.mxu0 0.0
    %294 = vmatprep.subr.mxu0 0.0
    %295 = vmatpush1.msra.mxu0 0.0
    %296 = vmatprep.subr.mxu0 0.0
    %297 = vmatpush1.msra.mxu0 0.0
    %298 = vmatprep.subr.mxu0 0.0
    %299 = vmatpush1.msra.mxu0 0.0
    %300 = vmatprep.subr.mxu0 0.0
    %301 = vmatpush1.msra.mxu0 0.0
    %302 = vmatprep.subr.mxu0 0.0
    %303 = vmatpush1.msra.mxu0 0.0
    %304 = vmatprep.subr.mxu0 0.0
    %305 = vmatpush1.msra.mxu0 0.0
    %306 = vmatprep.subr.mxu0 0.0
    %307 = vmatpush1.msra.mxu0 0.0
    %308 = vmatprep.subr.mxu0 0.0
    %v309 = vand.u32 %v40, 4294901760
    %310 = vmatpush1.msra.mxu0 %v309
    %311 = vmatprep.subr.mxu0 0.0
    %312 = vmatpush2.msra.mxu0 0.0
    %313 = vmatprep.subr.mxu0 0.0
    %314 = vmatpush2.msra.mxu0 0.0
    %315 = vmatprep.subr.mxu0 0.0
    %316 = vmatpush2.msra.mxu0 0.0
    %317 = vmatprep.subr.mxu0 0.0
    %318 = vmatpush2.msra.mxu0 0.0
    %319 = vmatprep.subr.mxu0 0.0
    %320 = vmatpush2.msra.mxu0 0.0
    %321 = vmatprep.subr.mxu0 0.0
    %322 = vmatpush2.msra.mxu0 0.0
    %323 = vmatprep.subr.mxu0 0.0
    %324 = vmatpush2.msra.mxu0 0.0
    %325 = vmatprep.subr.mxu0 0.0
    %326 = vmatpush2.msra.mxu0 0.0
    %327 = vmatprep.subr.mxu0 0.0
    %328 = vmatpush2.msra.mxu0 0.0
    %329 = vmatprep.subr.mxu0 0.0
    %330 = vmatpush2.msra.mxu0 0.0
    %331 = vmatprep.subr.mxu0 0.0
    %332 = vmatpush2.msra.mxu0 0.0
    %333 = vmatprep.subr.mxu0 0.0
    %334 = vmatpush2.msra.mxu0 0.0
    %335 = vmatprep.subr.mxu0 0.0
    %336 = vmatpush2.msra.mxu0 0.0
    %337 = vmatprep.subr.mxu0 0.0
    %338 = vmatpush2.msra.mxu0 0.0
    %339 = vmatprep.subr.mxu0 0.0
    %340 = vmatpush2.msra.mxu0 0.0
    %341 = vmatprep.subr.mxu0 0.0
    %342 = vmatpush2.msra.mxu0 0.0
    %343 = vmatprep.mubr.f32.mxu0 0.0
    %v344 = vand.u32 %v50, 4294901760
    %v345 = vsub.f32 %v50, %v344
    %v346 = vand.u32 %v345, 4294901760
    %347 = vmatmul.mubr.f32.gmra.mxu0 %v346
    %v348 = vpop.f32.mrf.mxu0
    %v349 = vadd.f32 %v275, %v348
    %v350 = vpop.f32.mrf.mxu0
    %351 = vdwg.mxu0
    %352 = vmatprep.subr.mxu0 0.0
    %353 = vmatpush1.msra.mxu0 0.0
    %354 = vmatprep.subr.mxu0 0.0
    %355 = vmatpush1.msra.mxu0 0.0
    %356 = vmatprep.subr.mxu0 0.0
    %357 = vmatpush1.msra.mxu0 0.0
    %358 = vmatprep.subr.mxu0 0.0
    %359 = vmatpush1.msra.mxu0 0.0
    %360 = vmatprep.subr.mxu0 0.0
    %361 = vmatpush1.msra.mxu0 0.0
    %362 = vmatprep.subr.mxu0 0.0
    %363 = vmatpush1.msra.mxu0 0.0
    %364 = vmatprep.subr.mxu0 0.0
    %365 = vmatpush1.msra.mxu0 0.0
    %366 = vmatprep.subr.mxu0 0.0
    %367 = vmatpush1.msra.mxu0 0.0
    %368 = vmatprep.subr.mxu0 0.0
    %369 = vmatpush1.msra.mxu0 0.0
    %370 = vmatprep.subr.mxu0 0.0
    %371 = vmatpush1.msra.mxu0 0.0
    %372 = vmatprep.subr.mxu0 0.0
    %373 = vmatpush1.msra.mxu0 0.0
    %374 = vmatprep.subr.mxu0 0.0
    %375 = vmatpush1.msra.mxu0 0.0
    %376 = vmatprep.subr.mxu0 0.0
    %377 = vmatpush1.msra.mxu0 0.0
    %378 = vmatprep.subr.mxu0 0.0
    %379 = vmatpush1.msra.mxu0 0.0
    %380 = vmatprep.subr.mxu0 0.0
    %381 = vmatpush1.msra.mxu0 0.0
    %382 = vmatprep.subr.mxu0 0.0
    %v383 = vand.u32 %v40, 4294901760
    %v384 = vsub.f32 %v40, %v383
    %v385 = vand.u32 %v384, 4294901760
    %386 = vmatpush1.msra.mxu0 %v385
    %387 = vmatprep.subr.mxu0 0.0
    %388 = vmatpush2.msra.mxu0 0.0
    %389 = vmatprep.subr.mxu0 0.0
    %390 = vmatpush2.msra.mxu0 0.0
    %391 = vmatprep.subr.mxu0 0.0
    %392 = vmatpush2.msra.mxu0 0.0
    %393 = vmatprep.subr.mxu0 0.0
    %394 = vmatpush2.msra.mxu0 0.0
    %395 = vmatprep.subr.mxu0 0.0
    %396 = vmatpush2.msra.mxu0 0.0
    %397 = vmatprep.subr.mxu0 0.0
    %398 = vmatpush2.msra.mxu0 0.0
    %399 = vmatprep.subr.mxu0 0.0
    %400 = vmatpush2.msra.mxu0 0.0
    %401 = vmatprep.subr.mxu0 0.0
    %402 = vmatpush2.msra.mxu0 0.0
    %403 = vmatprep.subr.mxu0 0.0
    %404 = vmatpush2.msra.mxu0 0.0
    %405 = vmatprep.subr.mxu0 0.0
    %406 = vmatpush2.msra.mxu0 0.0
    %407 = vmatprep.subr.mxu0 0.0
    %408 = vmatpush2.msra.mxu0 0.0
    %409 = vmatprep.subr.mxu0 0.0
    %410 = vmatpush2.msra.mxu0 0.0
    %411 = vmatprep.subr.mxu0 0.0
    %412 = vmatpush2.msra.mxu0 0.0
    %413 = vmatprep.subr.mxu0 0.0
    %414 = vmatpush2.msra.mxu0 0.0
    %415 = vmatprep.subr.mxu0 0.0
    %416 = vmatpush2.msra.mxu0 0.0
    %417 = vmatprep.subr.mxu0 0.0
    %418 = vmatpush2.msra.mxu0 0.0
    %419 = vmatprep.mubr.f32.mxu0 0.0
    %v420 = vand.u32 %v50, 4294901760
    %421 = vmatmul.mubr.f32.gmra.mxu0 %v420
    %v422 = vpop.f32.mrf.mxu0
    %v423 = vadd.f32 %v349, %v422
    %v424 = vpop.f32.mrf.mxu0
    %425 = vdwg.mxu0
    %426 = vmatprep.subr.mxu0 0.0
    %427 = vmatpush1.msra.mxu0 0.0
    %428 = vmatprep.subr.mxu0 0.0
    %429 = vmatpush1.msra.mxu0 0.0
    %430 = vmatprep.subr.mxu0 0.0
    %431 = vmatpush1.msra.mxu0 0.0
    %432 = vmatprep.subr.mxu0 0.0
    %433 = vmatpush1.msra.mxu0 0.0
    %434 = vmatprep.subr.mxu0 0.0
    %435 = vmatpush1.msra.mxu0 0.0
    %436 = vmatprep.subr.mxu0 0.0
    %437 = vmatpush1.msra.mxu0 0.0
    %438 = vmatprep.subr.mxu0 0.0
    %439 = vmatpush1.msra.mxu0 0.0
    %440 = vmatprep.subr.mxu0 0.0
    %441 = vmatpush1.msra.mxu0 0.0
    %442 = vmatprep.subr.mxu0 0.0
    %443 = vmatpush1.msra.mxu0 0.0
    %444 = vmatprep.subr.mxu0 0.0
    %445 = vmatpush1.msra.mxu0 0.0
    %446 = vmatprep.subr.mxu0 0.0
    %447 = vmatpush1.msra.mxu0 0.0
    %448 = vmatprep.subr.mxu0 0.0
    %449 = vmatpush1.msra.mxu0 0.0
    %450 = vmatprep.subr.mxu0 0.0
    %451 = vmatpush1.msra.mxu0 0.0
    %452 = vmatprep.subr.mxu0 0.0
    %453 = vmatpush1.msra.mxu0 0.0
    %454 = vmatprep.subr.mxu0 0.0
    %455 = vmatpush1.msra.mxu0 0.0
    %456 = vmatprep.subr.mxu0 0.0
    %v457 = vand.u32 %v40, 4294901760
    %458 = vmatpush1.msra.mxu0 %v457
    %459 = vmatprep.subr.mxu0 0.0
    %460 = vmatpush2.msra.mxu0 0.0
    %461 = vmatprep.subr.mxu0 0.0
    %462 = vmatpush2.msra.mxu0 0.0
    %463 = vmatprep.subr.mxu0 0.0
    %464 = vmatpush2.msra.mxu0 0.0
    %465 = vmatprep.subr.mxu0 0.0
    %466 = vmatpush2.msra.mxu0 0.0
    %467 = vmatprep.subr.mxu0 0.0
    %468 = vmatpush2.msra.mxu0 0.0
    %469 = vmatprep.subr.mxu0 0.0
    %470 = vmatpush2.msra.mxu0 0.0
    %471 = vmatprep.subr.mxu0 0.0
    %472 = vmatpush2.msra.mxu0 0.0
    %473 = vmatprep.subr.mxu0 0.0
    %474 = vmatpush2.msra.mxu0 0.0
    %475 = vmatprep.subr.mxu0 0.0
    %476 = vmatpush2.msra.mxu0 0.0
    %477 = vmatprep.subr.mxu0 0.0
    %478 = vmatpush2.msra.mxu0 0.0
    %479 = vmatprep.subr.mxu0 0.0
    %480 = vmatpush2.msra.mxu0 0.0
    %481 = vmatprep.subr.mxu0 0.0
    %482 = vmatpush2.msra.mxu0 0.0
    %483 = vmatprep.subr.mxu0 0.0
    %484 = vmatpush2.msra.mxu0 0.0
    %485 = vmatprep.subr.mxu0 0.0
    %486 = vmatpush2.msra.mxu0 0.0
    %487 = vmatprep.subr.mxu0 0.0
    %488 = vmatpush2.msra.mxu0 0.0
    %489 = vmatprep.subr.mxu0 0.0
    %490 = vmatpush2.msra.mxu0 0.0
    %491 = vmatprep.mubr.f32.mxu0 0.0
    %v492 = vand.u32 %v50, 4294901760
    %493 = vmatmul.mubr.f32.gmra.mxu0 %v492
    %v494 = vpop.f32.mrf.mxu0
    %v495 = vadd.f32 %v423, %v494
    %v496 = vpop.f32.mrf.mxu0
    %497 = vdwg.mxu0
    %498 = vst [vmem:[#allocation7] sm:$0xff] %v495
    // Predicated region
    $region22: #{tpu_custom_call.1} parent=1 // pred_check
      _
    $region23: #{tpu_custom_call.1} parent=1 // pred_check_branch
      %500 = sbr.rel (0) target = $region25
    $region24: #{tpu_custom_call.1} parent=1 // pred_region
      %s502 = ssub.s32 128, 128
      %503 = vsyncadd [#allocation4], %s502
      %s505 = sshll.u32 [#allocation7], 4
      %s506 = int_to_ptr.vmem [resolvable:$true] %s505
      %508 = dma.vmem_to_hbm [thread:$0]  %s506, 128, %s3, [#allocation4]
    $region25: #{tpu_custom_call.1} parent=1 // pred_fallthru
      _
    // Predicated region
    $region26: #{tpu_custom_call.1} parent=1 // pred_check
      _
    $region27: #{tpu_custom_call.1} parent=1 // pred_check_branch
      %510 = sbr.rel (0) target = $region29
    $region28: #{tpu_custom_call.1} parent=1 // pred_region
      %511 = dma.done [#allocation4], 128
    $region29: #{tpu_custom_call.1} parent=1 // pred_fallthru
      _
    %512 = vsyncpa [#allocation3], 1
    %513 = vsyncpa [#allocation6], 1
    %514 = vsyncpa [#allocation4], 1

</llo_original>
